<compile_context>
chip_gen: v5e
topology: v5e:2x2
jax: 0.10.0
libtpu: 0.0.40
codegen_flags: <defaults>
</compile_context>

<pallas_src>
import functools

import jax
import jax.numpy as jnp
from jax.experimental import pallas as pl
from jax.experimental.pallas import tpu as pltpu


# ----------------------------------------------------------------------------
# Helpers
# ----------------------------------------------------------------------------

_TM_MAX = 1024   # full-M row tile for CLIP-sized M = B*S
_TN = 512        # MXU-friendly (multiple of 256/128), well inside VMEM budgets
_TK = 512


def _round_up(x, m):
    return ((x + m - 1) // m) * m


def _pad2d(a, rows, cols):
    r, c = a.shape
    if r == rows and c == cols:
        return a
    return jnp.pad(a, ((0, rows - r), (0, cols - c)))


def _slice2d(a, rows, cols):
    return a if a.shape == (rows, cols) else a[:rows, :cols]


# ----------------------------------------------------------------------------
# Tiled linear: bf16 activation & weight DMA, f32 accumulation directly into
# the output block (resident across the k axis), optional bias / QuickGELU.
# ----------------------------------------------------------------------------

def _linear_kernel(*refs, activation, has_bias):
    if has_bias:
        x_ref, w_ref, b_ref, o_ref = refs
    else:
        x_ref, w_ref, o_ref = refs
        b_ref = None
    k = pl.program_id(2)

    @pl.when(k == 0)
    def _init():
        o_ref[...] = jnp.zeros_like(o_ref)

    o_ref[...] += jnp.dot(x_ref[...], w_ref[...],
                          preferred_element_type=jnp.float32)

    if has_bias or activation is not None:
        @pl.when(k == pl.num_programs(2) - 1)
        def _finish():
            y = o_ref[...]
            if b_ref is not None:
                y = y + b_ref[...]
            if activation == "quick_gelu":   # CLIP QuickGELU: x * sigmoid(1.702 x)
                y = y * jax.nn.sigmoid(1.702 * y)
            o_ref[...] = y


def pallas_linear(x, w, b=None, activation=None):
    """x: (M, K), w: (K, N), b: (N,) or None -> (M, N) f32."""
    M, K = x.shape
    N = w.shape[1]
    tm = min(_TM_MAX, _round_up(M, 8))        # full-M row tile for CLIP sizes
    tn = min(_TN, _round_up(N, 128))
    tk = min(_TK, _round_up(K, 128))
    Mp, Np, Kp = _round_up(M, tm), _round_up(N, tn), _round_up(K, tk)

    xp = _pad2d(x.astype(jnp.bfloat16), Mp, Kp)   # bf16 activation DMA
    wp = _pad2d(w.astype(jnp.bfloat16), Kp, Np)   # bf16 weight DMA

    in_specs = [pl.BlockSpec((tm, tk), lambda i, j, k: (i, k)),
                pl.BlockSpec((tk, tn), lambda i, j, k: (k, j))]
    args = [xp, wp]
    has_bias = b is not None
    if has_bias:
        in_specs.append(pl.BlockSpec((1, tn), lambda i, j, k: (0, j)))
        args.append(_pad2d(b.reshape(1, N).astype(jnp.float32), 1, Np))

    out = pl.pallas_call(
        functools.partial(_linear_kernel, activation=activation, has_bias=has_bias),
        out_shape=jax.ShapeDtypeStruct((Mp, Np), jnp.float32),
        grid=(Mp // tm, Np // tn, Kp // tk),
        in_specs=in_specs,
        out_specs=pl.BlockSpec((tm, tn), lambda i, j, k: (i, j)),
        compiler_params=pltpu.CompilerParams(
            dimension_semantics=("parallel", "parallel", "arbitrary")),
    )(*args)
    return _slice2d(out, M, N)


# ----------------------------------------------------------------------------
# Fused LayerNorm + linear.  LN stats in f32 on the full (untiled) feature
# axis; the normalized block is computed ONCE per row tile (pl.when(j == 0))
# into a bf16 VMEM scratch and reused across all output-column tiles.
# ----------------------------------------------------------------------------

def _ln_linear_kernel(*refs, activation, has_bias, eps):
    if has_bias:
        x_ref, g_ref, bt_ref, w_ref, b_ref, o_ref, xn_ref = refs
    else:
        x_ref, g_ref, bt_ref, w_ref, o_ref, xn_ref = refs
        b_ref = None
    j = pl.program_id(1)

    @pl.when(j == 0)
    def _norm():
        x = x_ref[...].astype(jnp.float32)
        mu = jnp.mean(x, axis=-1, keepdims=True)
        var = jnp.mean(jnp.square(x - mu), axis=-1, keepdims=True)
        xn = (x - mu) * jax.lax.rsqrt(var + eps)
        xn_ref[...] = (xn * g_ref[...] + bt_ref[...]).astype(xn_ref.dtype)

    y = jnp.dot(xn_ref[...], w_ref[...], preferred_element_type=jnp.float32)
    if b_ref is not None:
        y = y + b_ref[...]
    if activation == "quick_gelu":
        y = y * jax.nn.sigmoid(1.702 * y)
    o_ref[...] = y.astype(o_ref.dtype)


def pallas_ln_linear(x, gamma, beta, w, b=None, activation=None, eps=1e-5,
                     out_dtype=jnp.float32):
    """LayerNorm(x) @ w (+ b): x (M, K), w (K, N) -> (M, N) out_dtype."""
    M, K = x.shape
    N = w.shape[1]
    tm = min(_TM_MAX, _round_up(M, 8))
    tn = min(_TN, _round_up(N, 128))
    Mp, Np = _round_up(M, tm), _round_up(N, tn)

    xp = _pad2d(x.astype(jnp.float32), Mp, K)      # f32 input: exact LN stats
    wp = _pad2d(w.astype(jnp.bfloat16), K, Np)

    in_specs = [pl.BlockSpec((tm, K), lambda i, j: (i, 0)),
                pl.BlockSpec((1, K), lambda i, j: (0, 0)),
                pl.BlockSpec((1, K), lambda i, j: (0, 0)),
                pl.BlockSpec((K, tn), lambda i, j: (0, j))]
    args = [xp, gamma.reshape(1, K).astype(jnp.float32),
            beta.reshape(1, K).astype(jnp.float32), wp]
    has_bias = b is not None
    if has_bias:
        in_specs.append(pl.BlockSpec((1, tn), lambda i, j: (0, j)))
        args.append(_pad2d(b.reshape(1, N).astype(jnp.float32), 1, Np))

    out = pl.pallas_call(
        functools.partial(_ln_linear_kernel, activation=activation,
                          has_bias=has_bias, eps=eps),
        out_shape=jax.ShapeDtypeStruct((Mp, Np), out_dtype),
        grid=(Mp // tm, Np // tn),
        in_specs=in_specs,
        out_specs=pl.BlockSpec((tm, tn), lambda i, j: (i, j)),
        scratch_shapes=[pltpu.VMEM((tm, K), jnp.bfloat16)],
        # j must stay "arbitrary": the cached normalized block is computed at
        # j == 0 and reused for all subsequent j on the same core.
        compiler_params=pltpu.CompilerParams(
            dimension_semantics=("parallel", "arbitrary")),
    )(*args)
    return _slice2d(out, M, N)


# ----------------------------------------------------------------------------
# Row-tiled standalone LayerNorm (used only for ln_pre)
# ----------------------------------------------------------------------------

def _layernorm_kernel(x_ref, g_ref, b_ref, o_ref, *, eps):
    x = x_ref[...].astype(jnp.float32)
    mu = jnp.mean(x, axis=-1, keepdims=True)
    var = jnp.mean(jnp.square(x - mu), axis=-1, keepdims=True)
    y = (x - mu) * jax.lax.rsqrt(var + eps)
    o_ref[...] = (y * g_ref[...] + b_ref[...]).astype(o_ref.dtype)


def pallas_layernorm(x, gamma, beta, eps=1e-5):
    M, D = x.shape
    tm = min(_TM_MAX, _round_up(M, 8))
    Mp = _round_up(M, tm)
    xp = _pad2d(x.astype(jnp.float32), Mp, D)
    out = pl.pallas_call(
        functools.partial(_layernorm_kernel, eps=eps),
        out_shape=jax.ShapeDtypeStruct((Mp, D), jnp.float32),
        grid=(Mp // tm,),
        in_specs=[pl.BlockSpec((tm, D), lambda i: (i, 0)),
                  pl.BlockSpec((1, D), lambda i: (0, 0)),
                  pl.BlockSpec((1, D), lambda i: (0, 0))],
        out_specs=pl.BlockSpec((tm, D), lambda i: (i, 0)),
        compiler_params=pltpu.CompilerParams(dimension_semantics=("parallel",)),
    )(xp, gamma.reshape(1, D).astype(jnp.float32),
      beta.reshape(1, D).astype(jnp.float32))
    return out if Mp == M else out[:M]


# ----------------------------------------------------------------------------
# Multi-head attention: grid over (batch, head); per-head Q/K/V blocks via
# BlockSpec index_maps (no static head unroll, no concatenate, no in-kernel
# K transpose).  f32 scores/softmax, bf16 MXU inputs, bf16 output.
# ----------------------------------------------------------------------------

def _mha_kernel(q_ref, k_ref, v_ref, o_ref, *, scale, causal):
    q = q_ref[...]                      # (S, Dh) bf16
    k = k_ref[...]
    v = v_ref[...]
    # Contract the last dim of both operands: MXU handles the transposed
    # operand natively, no explicit K transpose / relayout.
    s = jax.lax.dot_general(q, k, (((1,), (1,)), ((), ())),
                            preferred_element_type=jnp.float32)
    s = s * scale
    if causal:
        S = s.shape[0]
        row = jax.lax.broadcasted_iota(jnp.int32, (S, S), 0)
        col = jax.lax.broadcasted_iota(jnp.int32, (S, S), 1)
        s = s + jnp.where(col > row, jnp.float32(-1e9), jnp.float32(0.0))
    s = s - jnp.max(s, axis=-1, keepdims=True)
    p = jnp.exp(s)
    p = p * pl.reciprocal(jnp.sum(p, axis=-1, keepdims=True), approx=True)
    o_ref[...] = jnp.dot(p.astype(jnp.bfloat16), v,
                         preferred_element_type=jnp.float32).astype(o_ref.dtype)


def pallas_attention(qkv, batch, seq, num_heads, causal):
    """qkv: (B*S, 3D) bf16 from the fused LN1+QKV projection -> (B*S, D) bf16."""
    D = qkv.shape[1] // 3
    Dh = D // num_heads
    scale = float(Dh) ** -0.5
    # Layout plumbing only: (B*S, 3D) -> (3, B, H, S, Dh), split into Q/K/V.
    qkv5 = qkv.reshape(batch, seq, 3, num_heads, Dh).transpose(2, 0, 3, 1, 4)
    q5, k5, v5 = qkv5[0], qkv5[1], qkv5[2]          # each (B, H, S, Dh)
    spec = pl.BlockSpec((None, None, seq, Dh), lambda b, h: (b, h, 0, 0))
    out = pl.pallas_call(
        functools.partial(_mha_kernel, scale=scale, causal=causal),
        out_shape=jax.ShapeDtypeStruct((batch, num_heads, seq, Dh), jnp.bfloat16),
        grid=(batch, num_heads),
        in_specs=[spec, spec, spec],
        out_specs=pl.BlockSpec((None, None, seq, Dh), lambda b, h: (b, h, 0, 0)),
        compiler_params=pltpu.CompilerParams(
            dimension_semantics=("parallel", "parallel")),
    )(q5, k5, v5)
    return out.transpose(0, 2, 1, 3).reshape(batch * seq, D)


# ----------------------------------------------------------------------------
# Transformer glue (composes the Pallas kernels; residual stream kept (M, D))
# ----------------------------------------------------------------------------

def residual_block(x2d, batch, seq, p, num_heads, causal):
    # LN1 fused into the QKV projection; QKV emitted in bf16 for attention.
    qkv = pallas_ln_linear(x2d, p["ln1_g"], p["ln1_b"], p["w_qkv"], p["b_qkv"],
                           out_dtype=jnp.bfloat16)
    attn = pallas_attention(qkv, batch, seq, num_heads, causal)   # (M, D) bf16
    attn = pallas_linear(attn, p["w_out"], p["b_out"])            # f32
    x2d = x2d + attn
    # LN2 fused into the MLP up-projection (QuickGELU); hidden kept in bf16.
    h = pallas_ln_linear(x2d, p["ln2_g"], p["ln2_b"], p["w_fc"], p["b_fc"],
                         activation="quick_gelu", out_dtype=jnp.bfloat16)
    h = pallas_linear(h, p["w_proj"], p["b_proj"])                # f32
    return x2d + h


def encode_image(images, params, cfg):
    B, C, H, W = images.shape
    P = cfg["patch"]
    Dv = cfg["vision_width"]
    Hp, Wp = H // P, W // P
    # Patch-conv (kernel=stride=P, bias-free) as matmul on unfolded patches,
    # flatten order (C, kh, kw) matching torch Conv2d weight flattening.
    patches = (images.reshape(B, C, Hp, P, Wp, P)
               .transpose(0, 2, 4, 1, 3, 5)
               .reshape(B * Hp * Wp, C * P * P))
    x = pallas_linear(patches, params["conv_w"])
    x = x.reshape(B, Hp * Wp, Dv)
    cls = jnp.broadcast_to(params["class_emb"].reshape(1, 1, Dv), (B, 1, Dv))
    x = jnp.concatenate([cls, x], axis=1) + params["vis_pos"][None]
    S = x.shape[1]
    x2d = pallas_layernorm(x.reshape(B * S, Dv),
                           params["ln_pre_g"], params["ln_pre_b"])
    x2d = residual_block(x2d, B, S, params["vis_block"], cfg["vision_heads"],
                         causal=False)
    # ln_post fused into the (bias-free) output projection.
    feats = pallas_ln_linear(x2d, params["ln_post_g"], params["ln_post_b"],
                             params["vis_proj"])
    return feats.reshape(B, S, cfg["embed_dim"])


def encode_text(caption_ids, params, cfg):
    B, L = caption_ids.shape
    Dt = cfg["text_width"]
    x = jnp.take(params["token_emb"], caption_ids, axis=0) + params["txt_pos"][None]
    x2d = residual_block(x.reshape(B * L, Dt), B, L, params["txt_block"],
                         cfg["text_heads"], causal=True)
    # ln_final fused into the (bias-free) text projection.
    feats = pallas_ln_linear(x2d, params["ln_final_g"], params["ln_final_b"],
                             params["text_proj"])
    return feats.reshape(B, L, cfg["embed_dim"])


def mcrsa_forward(params, cfg, batch):
    images = batch["images"].astype(jnp.float32)
    caption_ids = batch["caption_ids"]
    image_feats = encode_image(images, params, cfg)
    text_feats = encode_text(caption_ids, params, cfg)
    i_feats = image_feats[:, 0, :].astype(jnp.float32)
    # EOT selection via argmax(caption_ids): assumes the EOT token has the
    # largest vocab id (true for real CLIP tokenization).
    eot_idx = jnp.argmax(caption_ids, axis=-1)
    t_feats = text_feats[jnp.arange(text_feats.shape[0]), eot_idx].astype(jnp.float32)
    # TODO(synk): constraints.PPE_loss / MCU_loss / FSA_loss are external and
    # not provided; return the extracted features the losses would consume.
    return {"i_feats": i_feats, "t_feats": t_feats}


# ----------------------------------------------------------------------------
# Deterministic parameter init
# ----------------------------------------------------------------------------

def init_params(key, cfg):
    keys = iter(jax.random.split(key, 64))

    def nrm(shape, scale=0.02):
        return (scale * jax.random.normal(next(keys), shape)).astype(jnp.float32)

    def block(D):
        return {
            "ln1_g": jnp.ones((D,), jnp.float32), "ln1_b": jnp.zeros((D,), jnp.float32),
            "w_qkv": nrm((D, 3 * D)), "b_qkv": jnp.zeros((3 * D,), jnp.float32),
            "w_out": nrm((D, D)), "b_out": jnp.zeros((D,), jnp.float32),
            "ln2_g": jnp.ones((D,), jnp.float32), "ln2_b": jnp.zeros((D,), jnp.float32),
            "w_fc": nrm((D, 4 * D)), "b_fc": jnp.zeros((4 * D,), jnp.float32),
            "w_proj": nrm((4 * D, D)), "b_proj": jnp.zeros((D,), jnp.float32),
        }

    C, P = cfg["in_chans"], cfg["patch"]
    Dv, Dt, E = cfg["vision_width"], cfg["text_width"], cfg["embed_dim"]
    n_patches = (cfg["img_size"] // P) ** 2
    return {
        # vision tower
        "conv_w": nrm((C * P * P, Dv)),
        "class_emb": nrm((Dv,)),
        "vis_pos": nrm((n_patches + 1, Dv)),
        "ln_pre_g": jnp.ones((Dv,), jnp.float32), "ln_pre_b": jnp.zeros((Dv,), jnp.float32),
        "vis_block": block(Dv),
        "ln_post_g": jnp.ones((Dv,), jnp.float32), "ln_post_b": jnp.zeros((Dv,), jnp.float32),
        "vis_proj": nrm((Dv, E)),
        # text tower
        "token_emb": nrm((cfg["vocab_size"], Dt)),
        "txt_pos": nrm((cfg["context_length"], Dt)),
        "txt_block": block(Dt),
        "ln_final_g": jnp.ones((Dt,), jnp.float32), "ln_final_b": jnp.zeros((Dt,), jnp.float32),
        "text_proj": nrm((Dt, E)),
    }


# ----------------------------------------------------------------------------
# Main
# ----------------------------------------------------------------------------

if __name__ == "__main__":
    cfg = dict(img_size=16, patch=8, in_chans=3,
               vision_width=32, vision_heads=4,
               context_length=8, vocab_size=64,
               text_width=32, text_heads=4,
               embed_dim=32)

    root = jax.random.PRNGKey(0)
    k_param, k_img, k_txt = jax.random.split(root, 3)
    params = init_params(k_param, cfg)

    batch = {
        "images": jax.random.normal(k_img, (2, cfg["in_chans"],
                                            cfg["img_size"], cfg["img_size"]),
                                    dtype=jnp.float32),
        "caption_ids": jax.random.randint(k_txt, (2, cfg["context_length"]),
                                          1, cfg["vocab_size"], dtype=jnp.int32),
        "pids": jnp.arange(2, dtype=jnp.int32),
    }

    out = mcrsa_forward(params, cfg, batch)
    out = jax.block_until_ready(out)
    assert out["i_feats"].shape == (2, cfg["embed_dim"])
    assert out["t_feats"].shape == (2, cfg["embed_dim"])
    assert out["i_feats"].dtype == jnp.float32 and out["t_feats"].dtype == jnp.float32
    assert bool(jnp.all(jnp.isfinite(out["i_feats"]))) and bool(jnp.all(jnp.isfinite(out["t_feats"])))
    print("KERNEL_OK")
</pallas_src>

<mosaic_0001>
module attributes {stable_mosaic.version = 11 : i64} {
  func.func @_linear_kernel(%arg0: i32, %arg1: i32, %arg2: i32, %arg3: memref<8x256xbf16, #tpu.memory_space<vmem>>, %arg4: memref<256x128xbf16, #tpu.memory_space<vmem>>, %arg5: memref<8x128xf32, #tpu.memory_space<vmem>>) attributes {dimension_semantics = [#tpu.dimension_semantics<parallel>, #tpu.dimension_semantics<parallel>, #tpu.dimension_semantics<arbitrary>], iteration_bounds = array<i64: 1, 1, 1>, scalar_prefetch = 0 : i64, scratch_operands = 0 : i64, tpu.core_type = #tpu.core_type<tc>, window_params = [{transform_indices = @transform_0, window_bounds = array<i64: 8, 256>}, {transform_indices = @transform_1, window_bounds = array<i64: 256, 128>}, {transform_indices = @transform_2, window_bounds = array<i64: 8, 128>}]} {
    %c0_i32 = arith.constant 0 : i32
    %0 = arith.cmpi eq, %arg2, %c0_i32 : i32
    %1 = arith.extui %0 : i1 to i32
    %c0_i32_0 = arith.constant 0 : i32
    %2 = arith.cmpi ne, %1, %c0_i32_0 : i32
    scf.if %2 {
      %cst_8 = arith.constant 0.000000e+00 : f32
      %9 = vector.broadcast %cst_8 : f32 to vector<8x128xf32>
      %c0_9 = arith.constant 0 : index
      %c0_10 = arith.constant 0 : index
      %10 = vector.load %arg5[%c0_9, %c0_10] : memref<8x128xf32, #tpu.memory_space<vmem>>, vector<8x128xf32>
      tpu.vector_store %arg5[%c0_9, %c0_10], %9 {strides = array<i32>} : memref<8x128xf32, #tpu.memory_space<vmem>>, vector<8x128xf32>,
    } else {
    }
    %c0 = arith.constant 0 : index
    %c0_1 = arith.constant 0 : index
    %3 = vector.load %arg5[%c0, %c0_1] : memref<8x128xf32, #tpu.memory_space<vmem>>, vector<8x128xf32>
    %c0_2 = arith.constant 0 : index
    %c0_3 = arith.constant 0 : index
    %4 = vector.load %arg3[%c0_2, %c0_3] : memref<8x256xbf16, #tpu.memory_space<vmem>>, vector<8x256xbf16>
    %c0_4 = arith.constant 0 : index
    %c0_5 = arith.constant 0 : index
    %5 = vector.load %arg4[%c0_4, %c0_5] : memref<256x128xbf16, #tpu.memory_space<vmem>>, vector<256x128xbf16>
    %cst = arith.constant dense<0.000000e+00> : vector<8x128xf32>
    %6 = tpu.matmul %4, %5, %cst {dimension_numbers = #tpu.dot_dimension_numbers<[1], [0], [0], [1], [0, 0, 1, 1], [], []>} : vector<8x256xbf16>, vector<256x128xbf16>, vector<8x128xf32> -> vector<8x128xf32>
    %7 = arith.addf %3, %6 : vector<8x128xf32>
    %c0_6 = arith.constant 0 : index
    %c0_7 = arith.constant 0 : index
    %8 = vector.load %arg5[%c0_6, %c0_7] : memref<8x128xf32, #tpu.memory_space<vmem>>, vector<8x128xf32>
    tpu.vector_store %arg5[%c0_6, %c0_7], %7 {strides = array<i32>} : memref<8x128xf32, #tpu.memory_space<vmem>>, vector<8x128xf32>,
    return
  }
  func.func @transform_0(%arg0: i32, %arg1: i32, %arg2: i32) -> (i32, i32) {
    %c0_i32 = arith.constant 0 : i32
    return %arg0, %arg2 : i32, i32
  }
  func.func @transform_1(%arg0: i32, %arg1: i32, %arg2: i32) -> (i32, i32) {
    %c0_i32 = arith.constant 0 : i32
    return %arg2, %arg1 : i32, i32
  }
  func.func @transform_2(%arg0: i32, %arg1: i32, %arg2: i32) -> (i32, i32) {
    %c0_i32 = arith.constant 0 : i32
    return %arg0, %arg1 : i32, i32
  }
}

</mosaic_0001>

<llo_original>
// kernel: tpu_custom_call.1
$region0: #{tpu_custom_call.1}
  #allocation0 [shape = 'u32[]', space=smem, size = 0x4, offset = 0x4, fixed_abs, tag = 'smem constant byte address 0x4 - core index']
  #allocation1 [shape = 'u32[72,128]{1,0:T(1,128)}', space=vmem, size = 0x9000, scoped, tag = 'internal scratch']
  %s0 = inlined_call_operand.hbm [shape: bf16[8,256], index: 0, kind: input, shape index: {}]
  %s1 = inlined_call_operand.hbm [shape: bf16[256,128], index: 1, kind: input, shape index: {}]
  %s2 = inlined_call_operand.hbm [shape: f32[8,128], index: 2, kind: output, shape index: {}]
  %s3 = sld [smem:[#allocation0]]
  $region30: #{tpu_custom_call.1} parent=0
    _
  %s5 = ssub.s32 1, %s3
  %s6 = scalar_select 0, %s5, %s3
  $region1: #{tpu_custom_call.1} parent=0
    #allocation2 [shape = 'u8[4096]{0}', space=vmem, size = 0x1000, scoped, tag = 'input window, operand 0, single buffered']
    #allocation3 [shape = 's32[1]{0}', space=sflag, size = 0x4, scoped, tag = 'scoped memory for tpu_custom_call.1']
    #allocation4 [shape = 's32[1]{0}', space=sflag, size = 0x4, scoped, tag = 'scoped memory for tpu_custom_call.1']
    #allocation5 [shape = 'u8[65536]{0}', space=vmem, size = 0x10000, scoped, tag = 'input window, operand 1, single buffered']
    #allocation6 [shape = 's32[1]{0}', space=sflag, size = 0x4, scoped, tag = 'scoped memory for tpu_custom_call.1']
    #allocation7 [shape = 'u8[4096]{0}', space=vmem, size = 0x1000, scoped, tag = 'output window, operand 0, single buffered']
    %7 = vsyncpa [#allocation3], 0
    %8 = vsyncpa [#allocation6], 0
    %9 = vsyncpa [#allocation4], 0
    // Predicated region
    $region2: #{tpu_custom_call.1} parent=1 // pred_check
      _
    $region3: #{tpu_custom_call.1} parent=1 // pred_check_branch
      %11 = sbr.rel (0) target = $region5
    $region4: #{tpu_custom_call.1} parent=1 // pred_region
      %13 = vsyncadd [#allocation3], 0
      %s15 = sshll.u32 %s0, 4
      %s16 = int_to_ptr.hbm [resolvable:$true] %s15
      %s17 = sshll.u32 [#allocation2], 4
      %s18 = int_to_ptr.vmem [resolvable:$true] %s17
      %20 = dma.hbm_to_vmem [thread:$0]  %s16, 128, %s18, [#allocation3]
    $region5: #{tpu_custom_call.1} parent=1 // pred_fallthru
      _
    // Predicated region
    $region6: #{tpu_custom_call.1} parent=1 // pred_check
      _
    $region7: #{tpu_custom_call.1} parent=1 // pred_check_branch
      %22 = sbr.rel (0) target = $region9
    $region8: #{tpu_custom_call.1} parent=1 // pred_region
      %24 = vsyncadd [#allocation6], 0
      %s25 = sshll.u32 %s1, 4
      %s26 = int_to_ptr.hbm [resolvable:$true] %s25
      %s27 = sshll.u32 [#allocation5], 4
      %s28 = int_to_ptr.vmem [resolvable:$true] %s27
      %33 = dma.hbm_to_vmem [thread:$0]  %s26, 2048, %s28, [#allocation6], 64, 64, 4
    $region9: #{tpu_custom_call.1} parent=1 // pred_fallthru
      _
    // Predicated region
    $region10: #{tpu_custom_call.1} parent=1 // pred_check
      _
    $region11: #{tpu_custom_call.1} parent=1 // pred_check_branch
      %35 = sbr.rel (0) target = $region13
    $region12: #{tpu_custom_call.1} parent=1 // pred_region
      %37 = dma.done [#allocation3], 128
    $region13: #{tpu_custom_call.1} parent=1 // pred_fallthru
      _
    // Predicated region
    $region14: #{tpu_custom_call.1} parent=1 // pred_check
      _
    $region15: #{tpu_custom_call.1} parent=1 // pred_check_branch
      %39 = sbr.rel (0) target = $region17
    $region16: #{tpu_custom_call.1} parent=1 // pred_region
      %41 = dma.done [#allocation6], 2048
    $region17: #{tpu_custom_call.1} parent=1 // pred_fallthru
      _
    %p42 = scmp.eq.s32.totalorder 0, 0
    // Predicated region
    $region18: #{tpu_custom_call.1} parent=1 // pred_check
      %p43 = pneg %p42
    $region19: #{tpu_custom_call.1} parent=1 // pred_check_branch
      %45 = sbr.rel (%p43) target = $region21
    $region20: #{tpu_custom_call.1} parent=1 // pred_region
      %46 = vst [vmem:[#allocation7] sm:$0xff] 0.0
    $region21: #{tpu_custom_call.1} parent=1 // pred_fallthru
      _
    %v47 = vld [vmem:[#allocation7] sm:$0xff]
    %v48 = vld [vmem:[#allocation2] sm:$0xff]
    %v49 = vld [vmem:[#allocation5] sm:$0xf]
    %v50 = vld [vmem:[#allocation5 + $0x4] sm:$0xf]
    %v51 = vld [vmem:[#allocation5 + $0x8] sm:$0xf]
    %v52 = vld [vmem:[#allocation5 + $0xc] sm:$0xf]
    %v53 = vld [vmem:[#allocation5 + $0x10] sm:$0xf]
    %v54 = vld [vmem:[#allocation5 + $0x14] sm:$0xf]
    %v55 = vld [vmem:[#allocation5 + $0x18] sm:$0xf]
    %v56 = vld [vmem:[#allocation5 + $0x1c] sm:$0xf]
    %v57 = vld [vmem:[#allocation5 + $0x20] sm:$0xf]
    %v58 = vld [vmem:[#allocation5 + $0x24] sm:$0xf]
    %v59 = vld [vmem:[#allocation5 + $0x28] sm:$0xf]
    %v60 = vld [vmem:[#allocation5 + $0x2c] sm:$0xf]
    %v61 = vld [vmem:[#allocation5 + $0x30] sm:$0xf]
    %v62 = vld [vmem:[#allocation5 + $0x34] sm:$0xf]
    %v63 = vld [vmem:[#allocation5 + $0x38] sm:$0xf]
    %v64 = vld [vmem:[#allocation5 + $0x3c] sm:$0xf]
    %v65 = vld [vmem:[#allocation5 + $0x40] sm:$0xf]
    %v66 = vld [vmem:[#allocation5 + $0x44] sm:$0xf]
    %v67 = vld [vmem:[#allocation5 + $0x48] sm:$0xf]
    %v68 = vld [vmem:[#allocation5 + $0x4c] sm:$0xf]
    %v69 = vld [vmem:[#allocation5 + $0x50] sm:$0xf]
    %v70 = vld [vmem:[#allocation5 + $0x54] sm:$0xf]
    %v71 = vld [vmem:[#allocation5 + $0x58] sm:$0xf]
    %v72 = vld [vmem:[#allocation5 + $0x5c] sm:$0xf]
    %v73 = vld [vmem:[#allocation5 + $0x60] sm:$0xf]
    %v74 = vld [vmem:[#allocation5 + $0x64] sm:$0xf]
    %v75 = vld [vmem:[#allocation5 + $0x68] sm:$0xf]
    %v76 = vld [vmem:[#allocation5 + $0x6c] sm:$0xf]
    %v77 = vld [vmem:[#allocation5 + $0x70] sm:$0xf]
    %v78 = vld [vmem:[#allocation5 + $0x74] sm:$0xf]
    %v79 = vld [vmem:[#allocation5 + $0x78] sm:$0xf]
    %v80 = vld [vmem:[#allocation5 + $0x7c] sm:$0xf]
    %v82 = vunpack.c.l.b16 %v48
    %v83 = vunpack.c.h.b16 %v48
    %v84 = vpack.c.b16 %v82, %v82
    %v85 = vpack.c.b16 %v83, %v83
    %v120 = vunpack.c.l.b16 %v49
    %v121 = vunpack.c.l.b16 %v50
    %v122 = vunpack.c.l.b16 %v51
    %v123 = vunpack.c.l.b16 %v52
    %v124 = vunpack.c.l.b16 %v53
    %v125 = vunpack.c.l.b16 %v54
    %v126 = vunpack.c.l.b16 %v55
    %v127 = vunpack.c.l.b16 %v56
    %v128 = vunpack.c.l.b16 %v57
    %v129 = vunpack.c.l.b16 %v58
    %v130 = vunpack.c.l.b16 %v59
    %v131 = vunpack.c.l.b16 %v60
    %v132 = vunpack.c.l.b16 %v61
    %v133 = vunpack.c.l.b16 %v62
    %v134 = vunpack.c.l.b16 %v63
    %v135 = vunpack.c.l.b16 %v64
    %v136 = vunpack.c.l.b16 %v65
    %v137 = vunpack.c.l.b16 %v66
    %v138 = vunpack.c.l.b16 %v67
    %v139 = vunpack.c.l.b16 %v68
    %v140 = vunpack.c.l.b16 %v69
    %v141 = vunpack.c.l.b16 %v70
    %v142 = vunpack.c.l.b16 %v71
    %v143 = vunpack.c.l.b16 %v72
    %v144 = vunpack.c.l.b16 %v73
    %v145 = vunpack.c.l.b16 %v74
    %v146 = vunpack.c.l.b16 %v75
    %v147 = vunpack.c.l.b16 %v76
    %v148 = vunpack.c.l.b16 %v77
    %v149 = vunpack.c.l.b16 %v78
    %v150 = vunpack.c.l.b16 %v79
    %v151 = vunpack.c.l.b16 %v80
    %v152 = vpack.c.b16 %v121, %v120
    %v153 = vpack.c.b16 %v123, %v122
    %v154 = vpack.c.b16 %v125, %v124
    %v155 = vpack.c.b16 %v127, %v126
    %v156 = vpack.c.b16 %v129, %v128
    %v157 = vpack.c.b16 %v131, %v130
    %v158 = vpack.c.b16 %v133, %v132
    %v159 = vpack.c.b16 %v135, %v134
    %v160 = vpack.c.b16 %v137, %v136
    %v161 = vpack.c.b16 %v139, %v138
    %v162 = vpack.c.b16 %v141, %v140
    %v163 = vpack.c.b16 %v143, %v142
    %v164 = vpack.c.b16 %v145, %v144
    %v165 = vpack.c.b16 %v147, %v146
    %v166 = vpack.c.b16 %v149, %v148
    %v167 = vpack.c.b16 %v151, %v150
    %184 = vmatpush.bf16.msra.mxu0 %v159
    %185 = vmatpush.bf16.msra.mxu0 %v158
    %186 = vmatpush.bf16.msra.mxu0 %v157
    %187 = vmatpush.bf16.msra.mxu0 %v156
    %188 = vmatpush.bf16.msra.mxu0 %v155
    %189 = vmatpush.bf16.msra.mxu0 %v154
    %190 = vmatpush.bf16.msra.mxu0 %v153
    %191 = vmatpush.bf16.msra.mxu0 %v152
    %192 = vmatmul.bf16.gmra.mxu0 %v84
    %v193 = vpop.f32.mrf.mxu0
    %v194 = vadd.f32 0.0, %v193
    %v195 = vpop.f32.mrf.mxu0
    %196 = vdwg.mxu0
    %197 = vmatpush.bf16.msra.mxu0 %v167
    %198 = vmatpush.bf16.msra.mxu0 %v166
    %199 = vmatpush.bf16.msra.mxu0 %v165
    %200 = vmatpush.bf16.msra.mxu0 %v164
    %201 = vmatpush.bf16.msra.mxu0 %v163
    %202 = vmatpush.bf16.msra.mxu0 %v162
    %203 = vmatpush.bf16.msra.mxu0 %v161
    %204 = vmatpush.bf16.msra.mxu0 %v160
    %205 = vmatmul.bf16.gmra.mxu0 %v85
    %v206 = vpop.f32.mrf.mxu0
    %v207 = vadd.f32 %v194, %v206
    %v208 = vpop.f32.mrf.mxu0
    %209 = vdwg.mxu0
    %v210 = vadd.f32 %v47, %v207
    %211 = vst [vmem:[#allocation7] sm:$0xff] %v210
    // Predicated region
    $region22: #{tpu_custom_call.1} parent=1 // pred_check
      _
    $region23: #{tpu_custom_call.1} parent=1 // pred_check_branch
      %213 = sbr.rel (0) target = $region25
    $region24: #{tpu_custom_call.1} parent=1 // pred_region
      %215 = vsyncadd [#allocation4], 0
      %s217 = sshll.u32 [#allocation7], 4
      %s218 = int_to_ptr.vmem [resolvable:$true] %s217
      %s219 = sshll.u32 %s2, 4
      %s220 = int_to_ptr.hbm [resolvable:$true] %s219
      %222 = dma.vmem_to_hbm [thread:$0]  %s218, 128, %s220, [#allocation4]
    $region25: #{tpu_custom_call.1} parent=1 // pred_fallthru
      _
    // Predicated region
    $region26: #{tpu_custom_call.1} parent=1 // pred_check
      _
    $region27: #{tpu_custom_call.1} parent=1 // pred_check_branch
      %224 = sbr.rel (0) target = $region29
    $region28: #{tpu_custom_call.1} parent=1 // pred_region
      %226 = dma.done [#allocation4], 128
    $region29: #{tpu_custom_call.1} parent=1 // pred_fallthru
      _
    %227 = vsyncpa [#allocation3], 1
    %228 = vsyncpa [#allocation6], 1
    %229 = vsyncpa [#allocation4], 1

</llo_original>
